<compile_context>
chip_gen: v5e
topology: v5e:2x2
jax: 0.10.0
libtpu: 0.0.40
codegen_flags: <defaults>
</compile_context>

<pallas_src>
import jax
import jax.numpy as jnp
from jax.experimental import pallas as pl
from jax.experimental.pallas import tpu as pltpu

D_IN = 784
D_OUT = 10


def net_v2_kernel(x_ref, w_ref, b_ref, o_ref):
    # x_ref: (tm, 784)  w_ref: (784, 10)  b_ref: (1, 10)  o_ref: (tm, 10)
    h = jnp.dot(x_ref[...], w_ref[...], preferred_element_type=jnp.float32)
    h = h + b_ref[...]                              # broadcast bias over rows
    # Numerically-stable softmax: identical math to exp(h)/sum(exp(h)), but
    # avoids overflow for large logits.  Cheap VPU/XLU work hidden under DMA.
    h = h - jnp.max(h, axis=1, keepdims=True)
    h = jnp.exp(h)                                  # EUP transcendental
    z = jnp.sum(h, axis=1, keepdims=True)           # row-wise reduction (dim=1)
    # approx=True -> EUP vrcp slot instead of a VPU divide (effectively free).
    o_ref[...] = (h * pl.reciprocal(z, approx=True)).astype(o_ref.dtype)


def _round_up(n, m):
    return ((n + m - 1) // m) * m


def net_v2_forward(x, W, B, *, tm=512, buffers=3):
    """x: (N, 784) f32, W: (784, 10) f32, B: (10,) f32 -> (N, 10) f32."""
    N = x.shape[0]
    B2 = B.reshape(1, D_OUT).astype(jnp.float32)

    # Clamp the row tile to the (sublane-aligned) batch so small batches don't
    # get padded up to a full 512-row tile.
    tm_eff = min(tm, _round_up(max(N, 1), 8))
    n_pad = _round_up(N, tm_eff)
    if n_pad != N:
        # Padded rows are zeros -> softmax(B), finite, and sliced off below.
        x = jnp.pad(x, ((0, n_pad - N), (0, 0)))
    grid_len = n_pad // tm_eff

    # x is the only large operand; give it a deeper pipeline when the grid is
    # long enough for extra buffering to matter.
    n_buf = max(2, min(buffers, grid_len))
    if n_buf > 2:
        x_spec = pl.BlockSpec((tm_eff, D_IN), lambda i: (i, 0),
                              pipeline_mode=pl.Buffered(n_buf))
    else:
        x_spec = pl.BlockSpec((tm_eff, D_IN), lambda i: (i, 0))

    # Scoped-VMEM budget: n_buf x-buffers + resident W/B + double-buffered out,
    # plus headroom for epilogue temps.  Clamped to stay inside every chip's
    # physical VMEM (v7x has 64 MiB total).
    vmem_bytes = (n_buf * tm_eff * D_IN * 4          # x tiles
                  + D_IN * D_OUT * 4 + D_OUT * 4     # W + bias (resident)
                  + 2 * tm_eff * D_OUT * 4)          # output tiles
    vmem_limit = int(min(max(vmem_bytes + (4 << 20), 16 << 20), 48 << 20))

    out = pl.pallas_call(
        net_v2_kernel,
        out_shape=jax.ShapeDtypeStruct((n_pad, D_OUT), jnp.float32),
        grid_spec=pltpu.PrefetchScalarGridSpec(
            num_scalar_prefetch=0,
            grid=(grid_len,),
            in_specs=[
                x_spec,                                          # x tile (rows i)
                pl.BlockSpec((D_IN, D_OUT), lambda i: (0, 0)),   # full W, resident
                pl.BlockSpec((1, D_OUT), lambda i: (0, 0)),      # full bias
            ],
            out_specs=pl.BlockSpec((tm_eff, D_OUT), lambda i: (i, 0)),
        ),
        compiler_params=pltpu.CompilerParams(
            dimension_semantics=("parallel",),
            vmem_limit_bytes=vmem_limit,
        ),
    )(x, W, B2)

    return out[:N]


def net_v2_reference(x, W, B):
    h = x @ W + B
    h = jnp.exp(h)
    z = jnp.sum(h, axis=1, keepdims=True)
    return h / z


if __name__ == "__main__":
    key = jax.random.PRNGKey(0)
    kx, kw = jax.random.split(key)

    # Deterministic parameter init (shapes from net_v2.__init__).
    W = jax.random.normal(kw, (D_IN, D_OUT), dtype=jnp.float32)   # torch.randn(784, 10)
    B = jnp.zeros((D_OUT,), dtype=jnp.float32)                    # torch.zeros(10)

    # Small batch, deliberately NOT a multiple of the tile, to exercise padding.
    N = 24
    x = jax.random.normal(kx, (N, D_IN), dtype=jnp.float32) * 0.1

    ref = net_v2_reference(x, W, B)

    # 1) Default large-tile path (tile clamped to the small batch, single step).
    out_a = jax.block_until_ready(net_v2_forward(x, W, B))
    # 2) Multi-step path with 3-deep x pipelining (grid = 3).
    out_b = jax.block_until_ready(net_v2_forward(x, W, B, tm=8))

    # Tolerance relaxed for the EUP approx reciprocal (~1e-3-class rel. error).
    for out in (out_a, out_b):
        assert out.shape == (N, D_OUT)
        assert jnp.allclose(out, ref, atol=2e-3, rtol=2e-3), "mismatch vs reference"

    print("KERNEL_OK")
</pallas_src>

<mosaic_0001>
module attributes {stable_mosaic.version = 11 : i64} {
  func.func @net_v2_kernel(%arg0: i32, %arg1: memref<24x784xf32, #tpu.memory_space<vmem>>, %arg2: memref<784x10xf32, #tpu.memory_space<vmem>>, %arg3: memref<1x10xf32, #tpu.memory_space<vmem>>, %arg4: memref<24x10xf32, #tpu.memory_space<vmem>>) attributes {dimension_semantics = [#tpu.dimension_semantics<parallel>], iteration_bounds = array<i64: 1>, scalar_prefetch = 0 : i64, scratch_operands = 0 : i64, tpu.core_type = #tpu.core_type<tc>, window_params = [{transform_indices = @transform_0, window_bounds = array<i64: 24, 784>}, {pipeline_mode = #tpu.pipeline_mode<synchronous>, transform_indices = @transform_1, window_bounds = array<i64: 784, 10>}, {pipeline_mode = #tpu.pipeline_mode<synchronous>, transform_indices = @transform_2, window_bounds = array<i64: 1, 10>}, {transform_indices = @transform_3, window_bounds = array<i64: 24, 10>}]} {
    %c0 = arith.constant 0 : index
    %c0_0 = arith.constant 0 : index
    %0 = vector.load %arg1[%c0, %c0_0] : memref<24x784xf32, #tpu.memory_space<vmem>>, vector<24x784xf32>
    %c0_1 = arith.constant 0 : index
    %c0_2 = arith.constant 0 : index
    %1 = vector.load %arg2[%c0_1, %c0_2] : memref<784x10xf32, #tpu.memory_space<vmem>>, vector<784x10xf32>
    %cst = arith.constant dense<0.000000e+00> : vector<24x10xf32>
    %2 = tpu.matmul %0, %1, %cst {dimension_numbers = #tpu.dot_dimension_numbers<[1], [0], [0], [1], [0, 0, 1, 1], [], []>} : vector<24x784xf32>, vector<784x10xf32>, vector<24x10xf32> -> vector<24x10xf32>
    %c0_3 = arith.constant 0 : index
    %c0_4 = arith.constant 0 : index
    %3 = vector.load %arg3[%c0_3, %c0_4] : memref<1x10xf32, #tpu.memory_space<vmem>>, vector<1x10xf32>
    %4 = vector.broadcast %3 : vector<1x10xf32> to vector<24x10xf32>
    %5 = arith.addf %2, %4 : vector<24x10xf32>
    %cst_5 = arith.constant dense<0xFF800000> : vector<24xf32>
    %6 = vector.multi_reduction <maximumf>, %5, %cst_5 [1] : vector<24x10xf32> to vector<24xf32>
    %7 = vector.shape_cast %6 : vector<24xf32> to vector<24x1xf32>
    %8 = vector.broadcast %7 : vector<24x1xf32> to vector<24x10xf32>
    %9 = arith.subf %5, %8 : vector<24x10xf32>
    %10 = math.exp %9 : vector<24x10xf32>
    %cst_6 = arith.constant dense<0.000000e+00> : vector<24xf32>
    %11 = vector.multi_reduction <add>, %10, %cst_6 [1] : vector<24x10xf32> to vector<24xf32>
    %12 = vector.shape_cast %11 : vector<24xf32> to vector<24x1xf32>
    %13 = tpu.reciprocal %12 {approx = true} : vector<24x1xf32> -> vector<24x1xf32>
    %14 = vector.broadcast %13 : vector<24x1xf32> to vector<24x10xf32>
    %15 = arith.mulf %10, %14 : vector<24x10xf32>
    %c0_7 = arith.constant 0 : index
    %c0_8 = arith.constant 0 : index
    %16 = vector.load %arg4[%c0_7, %c0_8] : memref<24x10xf32, #tpu.memory_space<vmem>>, vector<24x10xf32>
    tpu.vector_store %arg4[%c0_7, %c0_8], %15 {strides = array<i32>} : memref<24x10xf32, #tpu.memory_space<vmem>>, vector<24x10xf32>,
    return
  }
  func.func @transform_0(%arg0: i32) -> (i32, i32) {
    %c0_i32 = arith.constant 0 : i32
    %c0_i32_0 = arith.constant 0 : i32
    return %arg0, %c0_i32 : i32, i32
  }
  func.func @transform_1(%arg0: i32) -> (i32, i32) {
    %c0_i32 = arith.constant 0 : i32
    %c0_i32_0 = arith.constant 0 : i32
    %c0_i32_1 = arith.constant 0 : i32
    return %c0_i32, %c0_i32_0 : i32, i32
  }
  func.func @transform_2(%arg0: i32) -> (i32, i32) {
    %c0_i32 = arith.constant 0 : i32
    %c0_i32_0 = arith.constant 0 : i32
    %c0_i32_1 = arith.constant 0 : i32
    return %c0_i32, %c0_i32_0 : i32, i32
  }
  func.func @transform_3(%arg0: i32) -> (i32, i32) {
    %c0_i32 = arith.constant 0 : i32
    %c0_i32_0 = arith.constant 0 : i32
    return %arg0, %c0_i32 : i32, i32
  }
}

</mosaic_0001>

<llo_original>
// kernel: tpu_custom_call.1
$region0: #{tpu_custom_call.1}
  #allocation0 [shape = 'u32[]', space=smem, size = 0x4, offset = 0x4, fixed_abs, tag = 'smem constant byte address 0x4 - core index']
  #allocation1 [shape = 'u32[72,128]{1,0:T(1,128)}', space=vmem, size = 0x9000, scoped, tag = 'internal scratch']
  %s0 = inlined_call_operand.vmem [shape: f32[24,784], index: 0, kind: input, shape index: {}]
  %s1 = inlined_call_operand.vmem [shape: f32[784,10], index: 1, kind: input, shape index: {}]
  %s2 = inlined_call_operand.vmem [shape: f32[1,10], index: 2, kind: input, shape index: {}]
  %s3 = inlined_call_operand.vmem [shape: f32[24,10], index: 3, kind: output, shape index: {}]
  %s4 = sld [smem:[#allocation0]]
  $region22: #{tpu_custom_call.1} parent=0
    _
  %s6 = ssub.s32 1, %s4
  %s7 = scalar_select 0, %s6, %s4
  // Predicated region
  $region2: #{tpu_custom_call.1} parent=0 // pred_check
    _
  $region3: #{tpu_custom_call.1} parent=0 // pred_check_branch
    %9 = sbr.rel (0) target = $region5
  $region4: #{tpu_custom_call.1} parent=0 // pred_region
    _
  $region5: #{tpu_custom_call.1} parent=0 // pred_fallthru
    _
  // Predicated region
  $region6: #{tpu_custom_call.1} parent=0 // pred_check
    _
  $region7: #{tpu_custom_call.1} parent=0 // pred_check_branch
    %11 = sbr.rel (0) target = $region9
  $region8: #{tpu_custom_call.1} parent=0 // pred_region
    _
  $region9: #{tpu_custom_call.1} parent=0 // pred_fallthru
    _
  // Predicated region
  $region10: #{tpu_custom_call.1} parent=0 // pred_check
    _
  $region11: #{tpu_custom_call.1} parent=0 // pred_check_branch
    %13 = sbr.rel (0) target = $region13
  $region12: #{tpu_custom_call.1} parent=0 // pred_region
    _
  $region13: #{tpu_custom_call.1} parent=0 // pred_fallthru
    _
  %v14 = vld [vmem:[%s0] sm:$0xff]
  %v15 = vld [vmem:[%s0 + $0x8] sm:$0xff]
  %v16 = vld [vmem:[%s0 + $0x10] sm:$0xff]
  %v17 = vld [vmem:[%s0 + $0x18] sm:$0xff]
  %v18 = vld [vmem:[%s0 + $0x20] sm:$0xff]
  %v19 = vld [vmem:[%s0 + $0x28] sm:$0xff]
  %v20 = vld [vmem:[%s0 + $0x30] sm:$0xff]
  %v21 = vld [vmem:[%s0 + $0x38] sm:$0xff]
  %v22 = vld [vmem:[%s0 + $0x40] sm:$0xff]
  %v23 = vld [vmem:[%s0 + $0x48] sm:$0xff]
  %v24 = vld [vmem:[%s0 + $0x50] sm:$0xff]
  %v25 = vld [vmem:[%s0 + $0x58] sm:$0xff]
  %v26 = vld [vmem:[%s0 + $0x60] sm:$0xff]
  %v27 = vld [vmem:[%s0 + $0x68] sm:$0xff]
  %v28 = vld [vmem:[%s0 + $0x70] sm:$0xff]
  %v29 = vld [vmem:[%s0 + $0x78] sm:$0xff]
  %v30 = vld [vmem:[%s0 + $0x80] sm:$0xff]
  %v31 = vld [vmem:[%s0 + $0x88] sm:$0xff]
  %v32 = vld [vmem:[%s0 + $0x90] sm:$0xff]
  %v33 = vld [vmem:[%s0 + $0x98] sm:$0xff]
  %v34 = vld [vmem:[%s0 + $0xa0] sm:$0xff]
  %v35 = vld [vmem:[%s1] sm:$0xff]
  %v36 = vld [vmem:[%s1 + $0x8] sm:$0xff]
  %v37 = vld [vmem:[%s1 + $0x10] sm:$0xff]
  %v38 = vld [vmem:[%s1 + $0x18] sm:$0xff]
  %v39 = vld [vmem:[%s1 + $0x20] sm:$0xff]
  %v40 = vld [vmem:[%s1 + $0x28] sm:$0xff]
  %v41 = vld [vmem:[%s1 + $0x30] sm:$0xff]
  %v42 = vld [vmem:[%s1 + $0x38] sm:$0xff]
  %v43 = vld [vmem:[%s1 + $0x40] sm:$0xff]
  %v44 = vld [vmem:[%s1 + $0x48] sm:$0xff]
  %v45 = vld [vmem:[%s1 + $0x50] sm:$0xff]
  %v46 = vld [vmem:[%s1 + $0x58] sm:$0xff]
  %v47 = vld [vmem:[%s1 + $0x60] sm:$0xff]
  %v48 = vld [vmem:[%s1 + $0x68] sm:$0xff]
  %v49 = vld [vmem:[%s1 + $0x70] sm:$0xff]
  %v50 = vld [vmem:[%s1 + $0x78] sm:$0xff]
  %v51 = vld [vmem:[%s1 + $0x80] sm:$0xff]
  %v52 = vld [vmem:[%s1 + $0x88] sm:$0xff]
  %v53 = vld [vmem:[%s1 + $0x90] sm:$0xff]
  %v54 = vld [vmem:[%s1 + $0x98] sm:$0xff]
  %v55 = vld [vmem:[%s1 + $0xa0] sm:$0xff]
  %v56 = vld [vmem:[%s1 + $0xa8] sm:$0xff]
  %v57 = vld [vmem:[%s1 + $0xb0] sm:$0xff]
  %v58 = vld [vmem:[%s1 + $0xb8] sm:$0xff]
  %v59 = vld [vmem:[%s1 + $0xc0] sm:$0xff]
  %v60 = vld [vmem:[%s1 + $0xc8] sm:$0xff]
  %v61 = vld [vmem:[%s1 + $0xd0] sm:$0xff]
  %v62 = vld [vmem:[%s1 + $0xd8] sm:$0xff]
  %v63 = vld [vmem:[%s1 + $0xe0] sm:$0xff]
  %v64 = vld [vmem:[%s1 + $0xe8] sm:$0xff]
  %v65 = vld [vmem:[%s1 + $0xf0] sm:$0xff]
  %v66 = vld [vmem:[%s1 + $0xf8] sm:$0xff]
  %v67 = vld [vmem:[%s1 + $0x100] sm:$0xff]
  %v68 = vld [vmem:[%s1 + $0x108] sm:$0xff]
  %v69 = vld [vmem:[%s1 + $0x110] sm:$0xff]
  %v70 = vld [vmem:[%s1 + $0x118] sm:$0xff]
  %v71 = vld [vmem:[%s1 + $0x120] sm:$0xff]
  %v72 = vld [vmem:[%s1 + $0x128] sm:$0xff]
  %v73 = vld [vmem:[%s1 + $0x130] sm:$0xff]
  %v74 = vld [vmem:[%s1 + $0x138] sm:$0xff]
  %v75 = vld [vmem:[%s1 + $0x140] sm:$0xff]
  %v76 = vld [vmem:[%s1 + $0x148] sm:$0xff]
  %v77 = vld [vmem:[%s1 + $0x150] sm:$0xff]
  %v78 = vld [vmem:[%s1 + $0x158] sm:$0xff]
  %v79 = vld [vmem:[%s1 + $0x160] sm:$0xff]
  %v80 = vld [vmem:[%s1 + $0x168] sm:$0xff]
  %v81 = vld [vmem:[%s1 + $0x170] sm:$0xff]
  %v82 = vld [vmem:[%s1 + $0x178] sm:$0xff]
  %v83 = vld [vmem:[%s1 + $0x180] sm:$0xff]
  %v84 = vld [vmem:[%s1 + $0x188] sm:$0xff]
  %v85 = vld [vmem:[%s1 + $0x190] sm:$0xff]
  %v86 = vld [vmem:[%s1 + $0x198] sm:$0xff]
  %v87 = vld [vmem:[%s1 + $0x1a0] sm:$0xff]
  %v88 = vld [vmem:[%s1 + $0x1a8] sm:$0xff]
  %v89 = vld [vmem:[%s1 + $0x1b0] sm:$0xff]
  %v90 = vld [vmem:[%s1 + $0x1b8] sm:$0xff]
  %v91 = vld [vmem:[%s1 + $0x1c0] sm:$0xff]
  %v92 = vld [vmem:[%s1 + $0x1c8] sm:$0xff]
  %v93 = vld [vmem:[%s1 + $0x1d0] sm:$0xff]
  %v94 = vld [vmem:[%s1 + $0x1d8] sm:$0xff]
  %v95 = vld [vmem:[%s1 + $0x1e0] sm:$0xff]
  %v96 = vld [vmem:[%s1 + $0x1e8] sm:$0xff]
  %v97 = vld [vmem:[%s1 + $0x1f0] sm:$0xff]
  %v98 = vld [vmem:[%s1 + $0x1f8] sm:$0xff]
  %v99 = vld [vmem:[%s1 + $0x200] sm:$0xff]
  %v100 = vld [vmem:[%s1 + $0x208] sm:$0xff]
  %v101 = vld [vmem:[%s1 + $0x210] sm:$0xff]
  %v102 = vld [vmem:[%s1 + $0x218] sm:$0xff]
  %v103 = vld [vmem:[%s1 + $0x220] sm:$0xff]
  %v104 = vld [vmem:[%s1 + $0x228] sm:$0xff]
  %v105 = vld [vmem:[%s1 + $0x230] sm:$0xff]
  %v106 = vld [vmem:[%s1 + $0x238] sm:$0xff]
  %v107 = vld [vmem:[%s1 + $0x240] sm:$0xff]
  %v108 = vld [vmem:[%s1 + $0x248] sm:$0xff]
  %v109 = vld [vmem:[%s1 + $0x250] sm:$0xff]
  %v110 = vld [vmem:[%s1 + $0x258] sm:$0xff]
  %v111 = vld [vmem:[%s1 + $0x260] sm:$0xff]
  %v112 = vld [vmem:[%s1 + $0x268] sm:$0xff]
  %v113 = vld [vmem:[%s1 + $0x270] sm:$0xff]
  %v114 = vld [vmem:[%s1 + $0x278] sm:$0xff]
  %v115 = vld [vmem:[%s1 + $0x280] sm:$0xff]
  %v116 = vld [vmem:[%s1 + $0x288] sm:$0xff]
  %v117 = vld [vmem:[%s1 + $0x290] sm:$0xff]
  %v118 = vld [vmem:[%s1 + $0x298] sm:$0xff]
  %v119 = vld [vmem:[%s1 + $0x2a0] sm:$0xff]
  %v120 = vld [vmem:[%s1 + $0x2a8] sm:$0xff]
  %v121 = vld [vmem:[%s1 + $0x2b0] sm:$0xff]
  %v122 = vld [vmem:[%s1 + $0x2b8] sm:$0xff]
  %v123 = vld [vmem:[%s1 + $0x2c0] sm:$0xff]
  %v124 = vld [vmem:[%s1 + $0x2c8] sm:$0xff]
  %v125 = vld [vmem:[%s1 + $0x2d0] sm:$0xff]
  %v126 = vld [vmem:[%s1 + $0x2d8] sm:$0xff]
  %v127 = vld [vmem:[%s1 + $0x2e0] sm:$0xff]
  %v128 = vld [vmem:[%s1 + $0x2e8] sm:$0xff]
  %v129 = vld [vmem:[%s1 + $0x2f0] sm:$0xff]
  %v130 = vld [vmem:[%s1 + $0x2f8] sm:$0xff]
  %v131 = vld [vmem:[%s1 + $0x300] sm:$0xff]
  %v132 = vld [vmem:[%s1 + $0x308] sm:$0xff]
  %v133 = vld [vmem:[%s2] sm:$0x1]
  %v135 = vperm.slane %v133, 0
  %vm137 = vcmask 130048
  %v139 = vsel %vm137, %v20, 0
  %v142 = vsel %vm137, %v27, 0
  %v145 = vsel %vm137, %v34, 0
  %147 = vmatpush.msra.mxu0 %v50
  %148 = vmatpush.msra.mxu0 %v49
  %149 = vmatpush.msra.mxu0 %v48
  %150 = vmatpush.msra.mxu0 %v47
  %151 = vmatpush.msra.mxu0 %v46
  %152 = vmatpush.msra.mxu0 %v45
  %153 = vmatpush.msra.mxu0 %v44
  %154 = vmatpush.msra.mxu0 %v43
  %155 = vmatpush.msra.mxu0 %v42
  %156 = vmatpush.msra.mxu0 %v41
  %157 = vmatpush.msra.mxu0 %v40
  %158 = vmatpush.msra.mxu0 %v39
  %159 = vmatpush.msra.mxu0 %v38
  %160 = vmatpush.msra.mxu0 %v37
  %161 = vmatpush.msra.mxu0 %v36
  %162 = vmatpush.msra.mxu0 %v35
  %163 = vmatmul.f32.gmra.mxu0 %v14
  %v164 = vpop.f32.mrf.mxu0
  %v165 = vadd.f32 %v135, %v164
  %166 = vmatmul.f32.gmra.mxu0 %v21
  %v167 = vpop.f32.mrf.mxu0
  %v168 = vadd.f32 %v135, %v167
  %169 = vmatmul.f32.gmra.mxu0 %v28
  %v170 = vpop.f32.mrf.mxu0
  %v171 = vadd.f32 %v135, %v170
  %172 = vdwg.mxu0
  %173 = vmatpush.msra.mxu0 %v66
  %174 = vmatpush.msra.mxu0 %v65
  %175 = vmatpush.msra.mxu0 %v64
  %176 = vmatpush.msra.mxu0 %v63
  %177 = vmatpush.msra.mxu0 %v62
  %178 = vmatpush.msra.mxu0 %v61
  %179 = vmatpush.msra.mxu0 %v60
  %180 = vmatpush.msra.mxu0 %v59
  %181 = vmatpush.msra.mxu0 %v58
  %182 = vmatpush.msra.mxu0 %v57
  %183 = vmatpush.msra.mxu0 %v56
  %184 = vmatpush.msra.mxu0 %v55
  %185 = vmatpush.msra.mxu0 %v54
  %186 = vmatpush.msra.mxu0 %v53
  %187 = vmatpush.msra.mxu0 %v52
  %188 = vmatpush.msra.mxu0 %v51
  %189 = vmatmul.f32.gmra.mxu0 %v15
  %v190 = vpop.f32.mrf.mxu0
  %v191 = vadd.f32 %v165, %v190
  %192 = vmatmul.f32.gmra.mxu0 %v22
  %v193 = vpop.f32.mrf.mxu0
  %v194 = vadd.f32 %v168, %v193
  %195 = vmatmul.f32.gmra.mxu0 %v29
  %v196 = vpop.f32.mrf.mxu0
  %v197 = vadd.f32 %v171, %v196
  %198 = vdwg.mxu0
  %199 = vmatpush.msra.mxu0 %v82
  %200 = vmatpush.msra.mxu0 %v81
  %201 = vmatpush.msra.mxu0 %v80
  %202 = vmatpush.msra.mxu0 %v79
  %203 = vmatpush.msra.mxu0 %v78
  %204 = vmatpush.msra.mxu0 %v77
  %205 = vmatpush.msra.mxu0 %v76
  %206 = vmatpush.msra.mxu0 %v75
  %207 = vmatpush.msra.mxu0 %v74
  %208 = vmatpush.msra.mxu0 %v73
  %209 = vmatpush.msra.mxu0 %v72
  %210 = vmatpush.msra.mxu0 %v71
  %211 = vmatpush.msra.mxu0 %v70
  %212 = vmatpush.msra.mxu0 %v69
  %213 = vmatpush.msra.mxu0 %v68
  %214 = vmatpush.msra.mxu0 %v67
  %215 = vmatmul.f32.gmra.mxu0 %v16
  %v216 = vpop.f32.mrf.mxu0
  %v217 = vadd.f32 %v191, %v216
  %218 = vmatmul.f32.gmra.mxu0 %v23
  %v219 = vpop.f32.mrf.mxu0
  %v220 = vadd.f32 %v194, %v219
  %221 = vmatmul.f32.gmra.mxu0 %v30
  %v222 = vpop.f32.mrf.mxu0
  %v223 = vadd.f32 %v197, %v222
  %224 = vdwg.mxu0
  %225 = vmatpush.msra.mxu0 %v98
  %226 = vmatpush.msra.mxu0 %v97
  %227 = vmatpush.msra.mxu0 %v96
  %228 = vmatpush.msra.mxu0 %v95
  %229 = vmatpush.msra.mxu0 %v94
  %230 = vmatpush.msra.mxu0 %v93
  %231 = vmatpush.msra.mxu0 %v92
  %232 = vmatpush.msra.mxu0 %v91
  %233 = vmatpush.msra.mxu0 %v90
  %234 = vmatpush.msra.mxu0 %v89
  %235 = vmatpush.msra.mxu0 %v88
  %236 = vmatpush.msra.mxu0 %v87
  %237 = vmatpush.msra.mxu0 %v86
  %238 = vmatpush.msra.mxu0 %v85
  %239 = vmatpush.msra.mxu0 %v84
  %240 = vmatpush.msra.mxu0 %v83
  %241 = vmatmul.f32.gmra.mxu0 %v17
  %v242 = vpop.f32.mrf.mxu0
  %v243 = vadd.f32 %v217, %v242
  %244 = vmatmul.f32.gmra.mxu0 %v24
  %v245 = vpop.f32.mrf.mxu0
  %v246 = vadd.f32 %v220, %v245
  %247 = vmatmul.f32.gmra.mxu0 %v31
  %v248 = vpop.f32.mrf.mxu0
  %v249 = vadd.f32 %v223, %v248
  %250 = vdwg.mxu0
  %251 = vmatpush.msra.mxu0 %v114
  %252 = vmatpush.msra.mxu0 %v113
  %253 = vmatpush.msra.mxu0 %v112
  %254 = vmatpush.msra.mxu0 %v111
  %255 = vmatpush.msra.mxu0 %v110
  %256 = vmatpush.msra.mxu0 %v109
  %257 = vmatpush.msra.mxu0 %v108
  %258 = vmatpush.msra.mxu0 %v107
  %259 = vmatpush.msra.mxu0 %v106
  %260 = vmatpush.msra.mxu0 %v105
  %261 = vmatpush.msra.mxu0 %v104
  %262 = vmatpush.msra.mxu0 %v103
  %263 = vmatpush.msra.mxu0 %v102
  %264 = vmatpush.msra.mxu0 %v101
  %265 = vmatpush.msra.mxu0 %v100
  %266 = vmatpush.msra.mxu0 %v99
  %267 = vmatmul.f32.gmra.mxu0 %v18
  %v268 = vpop.f32.mrf.mxu0
  %v269 = vadd.f32 %v243, %v268
  %270 = vmatmul.f32.gmra.mxu0 %v25
  %v271 = vpop.f32.mrf.mxu0
  %v272 = vadd.f32 %v246, %v271
  %273 = vmatmul.f32.gmra.mxu0 %v32
  %v274 = vpop.f32.mrf.mxu0
  %v275 = vadd.f32 %v249, %v274
  %276 = vdwg.mxu0
  %277 = vmatpush.msra.mxu0 %v130
  %278 = vmatpush.msra.mxu0 %v129
  %279 = vmatpush.msra.mxu0 %v128
  %280 = vmatpush.msra.mxu0 %v127
  %281 = vmatpush.msra.mxu0 %v126
  %282 = vmatpush.msra.mxu0 %v125
  %283 = vmatpush.msra.mxu0 %v124
  %284 = vmatpush.msra.mxu0 %v123
  %285 = vmatpush.msra.mxu0 %v122
  %286 = vmatpush.msra.mxu0 %v121
  %287 = vmatpush.msra.mxu0 %v120
  %288 = vmatpush.msra.mxu0 %v119
  %289 = vmatpush.msra.mxu0 %v118
  %290 = vmatpush.msra.mxu0 %v117
  %291 = vmatpush.msra.mxu0 %v116
  %292 = vmatpush.msra.mxu0 %v115
  %293 = vmatmul.f32.gmra.mxu0 %v19
  %v294 = vpop.f32.mrf.mxu0
  %v295 = vadd.f32 %v269, %v294
  %296 = vmatmul.f32.gmra.mxu0 %v26
  %v297 = vpop.f32.mrf.mxu0
  %v298 = vadd.f32 %v272, %v297
  %299 = vmatmul.f32.gmra.mxu0 %v33
  %v300 = vpop.f32.mrf.mxu0
  %v301 = vadd.f32 %v275, %v300
  %302 = vdwg.mxu0
  %303 = vmatpush.msra.mxu0 0.0
  %304 = vmatpush.msra.mxu0 0.0
  %305 = vmatpush.msra.mxu0 0.0
  %306 = vmatpush.msra.mxu0 0.0
  %307 = vmatpush.msra.mxu0 0.0
  %308 = vmatpush.msra.mxu0 0.0
  %309 = vmatpush.msra.mxu0 0.0
  %310 = vmatpush.msra.mxu0 0.0
  %311 = vmatpush.msra.mxu0 0.0
  %312 = vmatpush.msra.mxu0 0.0
  %313 = vmatpush.msra.mxu0 0.0
  %314 = vmatpush.msra.mxu0 0.0
  %315 = vmatpush.msra.mxu0 0.0
  %316 = vmatpush.msra.mxu0 0.0
  %317 = vmatpush.msra.mxu0 %v132
  %318 = vmatpush.msra.mxu0 %v131
  %319 = vmatmul.f32.gmra.mxu0 %v139
  %v320 = vpop.f32.mrf.mxu0
  %v321 = vadd.f32 %v295, %v320
  %322 = vmatmul.f32.gmra.mxu0 %v142
  %v323 = vpop.f32.mrf.mxu0
  %v324 = vadd.f32 %v298, %v323
  %325 = vmatmul.f32.gmra.mxu0 %v145
  %v326 = vpop.f32.mrf.mxu0
  %v327 = vadd.f32 %v301, %v326
  %328 = vdwg.mxu0
  %vm329 = vcmask 80896
  %v330 = vsel %vm329, %v321, -inf
  %331 = vmax.xlane.f32.xlu0 %v330
  %v332 = vpop.xlane.xlu0 %331
  %v333 = vsel %vm329, %v324, -inf
  %334 = vmax.xlane.f32.xlu0 %v333
  %v335 = vpop.xlane.xlu0 %334
  %v336 = vsel %vm329, %v327, -inf
  %337 = vmax.xlane.f32.xlu0 %v336
  %v338 = vpop.xlane.xlu0 %337
  %v339 = vsub.f32 %v321, %v332
  %v340 = vsub.f32 %v324, %v335
  %v341 = vsub.f32 %v327, %v338
  %v342 = vmul.f32 %v339, 1.442695
  %v343 = vpow.pop %v342
  %v344 = vmul.f32 %v340, 1.442695
  %v345 = vpow.pop %v344
  %v346 = vmul.f32 %v341, 1.442695
  %v347 = vpow.pop %v346
  %v348 = vsel %vm329, %v343, 0.0
  %349 = vadd.xlane.f32.xlu0 %v348
  %v350 = vpop.xlane.xlu0 %349
  %v351 = vsel %vm329, %v345, 0.0
  %352 = vadd.xlane.f32.xlu0 %v351
  %v353 = vpop.xlane.xlu0 %352
  %v354 = vsel %vm329, %v347, 0.0
  %355 = vadd.xlane.f32.xlu0 %v354
  %v356 = vpop.xlane.xlu0 %355
  %v357 = vrcp.pop %v350
  %v358 = vrcp.pop %v353
  %v359 = vrcp.pop %v356
  %v360 = vmul.f32 %v343, %v357
  %v361 = vmul.f32 %v345, %v358
  %v362 = vmul.f32 %v347, %v359
  %363 = vst.msk [vmem:[%s3] sm:$0xff] %vm329, %v360
  %364 = vst.msk [vmem:[%s3 + $0x8] sm:$0xff] %vm329, %v361
  %365 = vst.msk [vmem:[%s3 + $0x10] sm:$0xff] %vm329, %v362
  // Predicated region
  $region14: #{tpu_custom_call.1} parent=0 // pred_check
    _
  $region15: #{tpu_custom_call.1} parent=0 // pred_check_branch
    %367 = sbr.rel (0) target = $region17
  $region16: #{tpu_custom_call.1} parent=0 // pred_region
    _
  $region17: #{tpu_custom_call.1} parent=0 // pred_fallthru
    _
  // Predicated region
  $region18: #{tpu_custom_call.1} parent=0 // pred_check
    _
  $region19: #{tpu_custom_call.1} parent=0 // pred_check_branch
    %369 = sbr.rel (0) target = $region21
  $region20: #{tpu_custom_call.1} parent=0 // pred_region
    _
  $region21: #{tpu_custom_call.1} parent=0 // pred_fallthru
    _

</llo_original>
